<compile_context>
chip_gen: v7x
topology: tpu7x:2x2x1
jax: 0.10.0
libtpu: 0.0.40
codegen_flags: <defaults>
</compile_context>

<pallas_src>
import functools

import jax
import jax.numpy as jnp
from jax.experimental import pallas as pl
from jax.experimental.pallas import tpu as pltpu


def _cff_grouped_kernel(tile_expert_ref, tile_rows_ref, x_ref, w13_ref,
                        w2t_ref, o_ref, *, inter_size):
    # tile_expert_ref: (num_tiles,) SMEM int32 — expert id per tile (only used
    #                  by the BlockSpec index_maps to pick the weight block).
    # tile_rows_ref:   (num_tiles,) SMEM int32 — # real rows in tile (0 => skip)
    # x_ref:   (TM, D)     bf16 sorted/padded token rows of this tile
    # w13_ref: (1, D, 2I)  bf16 fused [gate | up] weights of this tile's expert
    # w2t_ref: (1, I, D)   bf16 down-proj weights (pre-transposed)
    # o_ref:   (TM, D)
    del tile_expert_ref
    t = pl.program_id(0)

    @pl.when(tile_rows_ref[t] > 0)
    def _():
        x = x_ref[...]
        w13 = w13_ref[0]
        w2t = w2t_ref[0]

        # Gate + up projection in one MXU matmul, f32 accumulation.
        h = jnp.dot(x, w13, preferred_element_type=jnp.float32)   # (TM, 2I)
        h1 = h[:, :inter_size]          # lane-aligned split (I % 128 == 0)
        h3 = h[:, inter_size:]
        g = (h1 * jax.nn.sigmoid(h1)) * h3                        # silu(h1)*h3, f32

        # Down projection, f32 accumulation.
        y = jnp.dot(g.astype(w2t.dtype), w2t,
                    preferred_element_type=jnp.float32)           # (TM, D)
        o_ref[...] = y.astype(o_ref.dtype)
    # Fully-padded tiles: output buffer left untouched; those rows are never
    # read back by the un-route gather.


def prepare_moe_weights(w1, w2, w3, dtype=jnp.bfloat16):
    """ONE-TIME weight re-layout (do this at checkpoint load, not per call).

    w1, w3: (E, I, D) gate / up projections.   w2: (E, D, I) down projection.
    Returns w13: (E, D, 2I) fused [gate | up], w2t: (E, I, D), both in `dtype`.
    """
    w13 = jnp.swapaxes(jnp.concatenate([w1, w3], axis=1), 1, 2).astype(dtype)
    w2t = jnp.swapaxes(w2, 1, 2).astype(dtype)
    return w13, w2t


def conditional_feed_forward(x, expert_indices, w13, w2t, *, token_tile=None):
    """MoE conditional FFN.

    x: (T, D) activations, expert_indices: (T, A) int -> (T, A, D).
    w13/w2t are the PRE-FUSED weights from `prepare_moe_weights`.
    """
    T, D = x.shape
    _, A = expert_indices.shape
    E, Dw, I2 = w13.shape
    I = I2 // 2
    assert Dw == D and w2t.shape == (E, I, D)
    # MXU / lane-alignment contract (keeps the h[:, :I] split relayout-free).
    assert D % 128 == 0, "model dim must be a multiple of 128"
    assert I % 128 == 0, "moe_intermediate_size must be a multiple of 128"

    S = T * A
    compute_dtype = w13.dtype

    def rup(a, b):
        return (a + b - 1) // b * b

    # Token tile: 256 for prefill-sized S (better weight-DMA amortization on
    # v5e/v6e), shrink towards S for decode to limit per-expert padding waste.
    TM = token_tile if token_tile is not None else min(256, max(rup(S, 16), 16))
    TM = rup(TM, 16)   # bf16 x tile: sublane packing of 16

    # ---- routing pre-pass (cheap, activation-sized XLA ops) -----------------
    flat_e = expert_indices.reshape(S).astype(jnp.int32)
    sort_idx = jnp.argsort(flat_e)                                 # (S,)
    sorted_e = flat_e[sort_idx]

    counts = jnp.bincount(flat_e, length=E)                        # (E,)
    padded_counts = ((counts + TM - 1) // TM) * TM
    unpadded_starts = jnp.cumsum(counts) - counts                  # excl. cumsum
    padded_ends = jnp.cumsum(padded_counts)
    padded_starts = padded_ends - padded_counts

    # Destination row of every assignment in the padded, expert-sorted buffer.
    rank = jnp.arange(S, dtype=jnp.int32) - unpadded_starts[sorted_e]
    dest_row = (padded_starts[sorted_e] + rank).astype(jnp.int32)  # unique rows

    # Static worst-case padded size (each non-empty group pads < TM rows).
    S_pad = rup(S + min(E, S) * (TM - 1), TM)
    num_tiles = S_pad // TM

    # Which flat assignment feeds each padded row (padding rows -> token 0;
    # their outputs are never read back).
    row_assign = jnp.zeros((S_pad,), jnp.int32).at[dest_row].set(
        sort_idx.astype(jnp.int32))
    x_sorted = x[row_assign // A].astype(compute_dtype)            # (S_pad, D) bf16

    # Per-tile expert id and real-row count (0 for fully-padded/overflow tiles).
    tile_starts = jnp.arange(num_tiles, dtype=jnp.int32) * TM
    raw_tile_expert = jnp.searchsorted(padded_ends, tile_starts, side='right')
    tile_expert = jnp.minimum(raw_tile_expert, E - 1).astype(jnp.int32)
    rows_left = counts[tile_expert] - (tile_starts - padded_starts[tile_expert])
    tile_rows = jnp.where(raw_tile_expert >= E, 0,
                          jnp.clip(rows_left, 0, TM)).astype(jnp.int32)

    # ---- VMEM budget ---------------------------------------------------------
    w_isz = jnp.dtype(compute_dtype).itemsize
    o_isz = jnp.dtype(x.dtype).itemsize
    block_vmem = 2 * (TM * D * w_isz          # x tile (double-buffered)
                      + D * 2 * I * w_isz     # fused w13 block
                      + I * D * w_isz         # w2t block
                      + TM * D * o_isz)       # output tile
    scratch_vmem = 2 * TM * 2 * I * 4         # f32 h / gate intermediates
    vmem_needed = block_vmem + scratch_vmem + (1 << 20)
    # v7x physical VMEM is 64 MiB/TC — if this trips, tile the 2I dimension.
    assert vmem_needed <= (64 << 20), (
        "fused weight block exceeds 64 MiB VMEM; tile the intermediate dim")
    vmem_limit = int(min(max(vmem_needed, 32 << 20), 64 << 20))

    grid_spec = pltpu.PrefetchScalarGridSpec(
        num_scalar_prefetch=2,
        grid=(num_tiles,),
        in_specs=[
            pl.BlockSpec((TM, D), lambda t, te, tr: (t, 0)),
            pl.BlockSpec((1, D, 2 * I), lambda t, te, tr: (te[t], 0, 0)),
            pl.BlockSpec((1, I, D), lambda t, te, tr: (te[t], 0, 0)),
        ],
        out_specs=pl.BlockSpec((TM, D), lambda t, te, tr: (t, 0)),
    )

    # Advisory cost estimate: each expert's weights cross HBM at most once per
    # pass (consecutive same-expert tiles reuse the resident block).
    weight_bytes = E * 3 * I * D * w_isz
    act_bytes = S_pad * D * (w_isz + o_isz)
    cost = pl.CostEstimate(
        flops=6 * S_pad * I * D,
        transcendentals=S_pad * I,
        bytes_accessed=int(weight_bytes + act_bytes),
    )

    out_sorted = pl.pallas_call(
        functools.partial(_cff_grouped_kernel, inter_size=I),
        out_shape=jax.ShapeDtypeStruct((S_pad, D), x.dtype),
        grid_spec=grid_spec,
        compiler_params=pltpu.CompilerParams(
            # "arbitrary": keep expert-sorted tiles sequential so each expert's
            # weights are DMA'd once; see v7x TODO at top for a core-aligned split.
            dimension_semantics=("arbitrary",),
            vmem_limit_bytes=vmem_limit),
        cost_estimate=cost,
    )(tile_expert, tile_rows, x_sorted, w13, w2t)

    # Un-route: padded expert-sorted rows back to (T, A, D).
    assignment_to_row = jnp.zeros((S,), jnp.int32).at[sort_idx].set(dest_row)
    return out_sorted[assignment_to_row].reshape(T, A, D)


def conditional_feed_forward_ref(x, expert_indices, w1, w2, w3):
    w1s = w1[expert_indices]   # (T, A, I, D)
    w3s = w3[expert_indices]   # (T, A, I, D)
    w2s = w2[expert_indices]   # (T, A, D, I)
    x1 = jax.nn.silu(jnp.einsum('ti,taoi->tao', x, w1s))
    x3 = jnp.einsum('ti,taoi->tao', x, w3s)
    return jnp.einsum('tao,taio->tai', x1 * x3, w2s)


if __name__ == "__main__":
    # small config: num_experts=4, dim=128, moe_intermediate_size=128,
    # T=8 tokens, A=2 active experts per token
    E, D, I = 4, 128, 128
    T, A = 8, 2

    key = jax.random.PRNGKey(0)
    k_x, k_w1, k_w2, k_w3, k_idx = jax.random.split(key, 5)

    x = jax.random.normal(k_x, (T, D), dtype=jnp.float32)
    w1 = 0.05 * jax.random.normal(k_w1, (E, I, D), dtype=jnp.float32)
    w2 = 0.05 * jax.random.normal(k_w2, (E, D, I), dtype=jnp.float32)
    w3 = 0.05 * jax.random.normal(k_w3, (E, I, D), dtype=jnp.float32)
    expert_indices = jax.random.randint(k_idx, (T, A), 0, E, dtype=jnp.int32)

    # One-time weight re-layout / bf16 cast (outside the per-call path).
    w13, w2t = prepare_moe_weights(w1, w2, w3, dtype=jnp.bfloat16)

    fwd = jax.jit(conditional_feed_forward)
    out = fwd(x, expert_indices, w13, w2t)
    out = jax.block_until_ready(out)

    ref = conditional_feed_forward_ref(x, expert_indices, w1, w2, w3)
    assert out.shape == (T, A, D)
    # bf16 weight/activation stream vs f32 reference.
    assert jnp.allclose(out, ref, rtol=2e-2, atol=2e-2), "mismatch vs reference"

    print("KERNEL_OK")
</pallas_src>

<mosaic_0001>
module attributes {stable_mosaic.version = 11 : i64} {
  func.func private @main(%arg0: i32) attributes {dimension_semantics = [#tpu.dimension_semantics<core_parallel>], iteration_bounds = array<i64: 2>, tpu.core_type = #tpu.core_type<sc_scalar_subcore>, window_params = []} {
    return
  }
}

module attributes {stable_mosaic.version = 11 : i64} {
  func.func private @main(%arg0: i32) attributes {dimension_semantics = [#tpu.dimension_semantics<core_parallel>], iteration_bounds = array<i64: 2>, tpu.core_type = #tpu.core_type<sc_scalar_subcore>, window_params = []} {
    return
  }
}

module attributes {stable_mosaic.version = 11 : i64} {
  func.func @_cff_grouped_kernel(%arg0: i32, %arg1: memref<5xi32, #tpu.memory_space<smem>>, %arg2: memref<5xi32, #tpu.memory_space<smem>>, %arg3: memref<16x128xbf16, #tpu.memory_space<vmem>>, %arg4: memref<1x128x256xbf16, #tpu.memory_space<vmem>>, %arg5: memref<1x128x128xbf16, #tpu.memory_space<vmem>>, %arg6: memref<16x128xf32, #tpu.memory_space<vmem>>) attributes {dimension_semantics = [#tpu.dimension_semantics<arbitrary>], iteration_bounds = array<i64: 5>, scalar_prefetch = 2 : i64, scratch_operands = 0 : i64, tpu.core_type = #tpu.core_type<tc>, window_params = [{transform_indices = @transform_0, window_bounds = array<i64: 16, 128>}, {transform_indices = @transform_1, window_bounds = array<i64: 1, 128, 256>}, {transform_indices = @transform_2, window_bounds = array<i64: 1, 128, 128>}, {transform_indices = @transform_3, window_bounds = array<i64: 16, 128>}]} {
    %0 = arith.index_cast %arg0 : i32 to index
    %1 = memref.load %arg2[%0] : memref<5xi32, #tpu.memory_space<smem>>
    %c0_i32 = arith.constant 0 : i32
    %2 = arith.cmpi sgt, %1, %c0_i32 : i32
    %3 = arith.extui %2 : i1 to i32
    %c0_i32_0 = arith.constant 0 : i32
    %4 = arith.cmpi ne, %3, %c0_i32_0 : i32
    scf.if %4 {
      %c0 = arith.constant 0 : index
      %c0_1 = arith.constant 0 : index
      %5 = vector.load %arg3[%c0, %c0_1] : memref<16x128xbf16, #tpu.memory_space<vmem>>, vector<16x128xbf16>
      %c0_2 = arith.constant 0 : index
      %c0_3 = arith.constant 0 : index
      %c0_4 = arith.constant 0 : index
      %6 = vector.load %arg4[%c0_2, %c0_3, %c0_4] : memref<1x128x256xbf16, #tpu.memory_space<vmem>>, vector<1x128x256xbf16>
      %7 = vector.shape_cast %6 : vector<1x128x256xbf16> to vector<128x256xbf16>
      %c0_5 = arith.constant 0 : index
      %c0_6 = arith.constant 0 : index
      %c0_7 = arith.constant 0 : index
      %8 = vector.load %arg5[%c0_5, %c0_6, %c0_7] : memref<1x128x128xbf16, #tpu.memory_space<vmem>>, vector<1x128x128xbf16>
      %9 = vector.shape_cast %8 : vector<1x128x128xbf16> to vector<128x128xbf16>
      %cst = arith.constant dense<0.000000e+00> : vector<16x256xf32>
      %10 = tpu.matmul %5, %7, %cst {dimension_numbers = #tpu.dot_dimension_numbers<[1], [0], [0], [1], [0, 0, 1, 1], [], []>} : vector<16x128xbf16>, vector<128x256xbf16>, vector<16x256xf32> -> vector<16x256xf32>
      %11 = vector.extract_strided_slice %10 {offsets = [0, 0], sizes = [16, 128], strides = [1, 1]} : vector<16x256xf32> to vector<16x128xf32>
      %12 = vector.extract_strided_slice %10 {offsets = [0, 128], sizes = [16, 128], strides = [1, 1]} : vector<16x256xf32> to vector<16x128xf32>
      %13 = arith.negf %11 : vector<16x128xf32>
      %14 = math.exp %13 : vector<16x128xf32>
      %cst_8 = arith.constant 1.000000e+00 : f32
      %15 = vector.broadcast %cst_8 : f32 to vector<16x128xf32>
      %16 = arith.addf %15, %14 : vector<16x128xf32>
      %17 = arith.divf %15, %16 : vector<16x128xf32>
      %18 = arith.mulf %11, %17 : vector<16x128xf32>
      %19 = arith.mulf %18, %12 : vector<16x128xf32>
      %20 = arith.truncf %19 : vector<16x128xf32> to vector<16x128xbf16>
      %cst_9 = arith.constant dense<0.000000e+00> : vector<16x128xf32>
      %21 = tpu.matmul %20, %9, %cst_9 {dimension_numbers = #tpu.dot_dimension_numbers<[1], [0], [0], [1], [0, 0, 1, 1], [], []>} : vector<16x128xbf16>, vector<128x128xbf16>, vector<16x128xf32> -> vector<16x128xf32>
      %c0_10 = arith.constant 0 : index
      %c0_11 = arith.constant 0 : index
      %22 = vector.load %arg6[%c0_10, %c0_11] : memref<16x128xf32, #tpu.memory_space<vmem>>, vector<16x128xf32>
      tpu.vector_store %arg6[%c0_10, %c0_11], %21 {strides = array<i32>} : memref<16x128xf32, #tpu.memory_space<vmem>>, vector<16x128xf32>,
    } else {
    }
    return
  }
  func.func @transform_0(%arg0: i32, %arg1: memref<5xi32, #tpu.memory_space<smem>>, %arg2: memref<5xi32, #tpu.memory_space<smem>>) -> (i32, i32) {
    %c0_i32 = arith.constant 0 : i32
    %c0_i32_0 = arith.constant 0 : i32
    return %arg0, %c0_i32 : i32, i32
  }
  func.func @transform_1(%arg0: i32, %arg1: memref<5xi32, #tpu.memory_space<smem>>, %arg2: memref<5xi32, #tpu.memory_space<smem>>) -> (i32, i32, i32) {
    %0 = arith.index_cast %arg0 : i32 to index
    %1 = memref.load %arg1[%0] : memref<5xi32, #tpu.memory_space<smem>>
    %c0_i32 = arith.constant 0 : i32
    %c0_i32_0 = arith.constant 0 : i32
    %c0_i32_1 = arith.constant 0 : i32
    return %1, %c0_i32, %c0_i32_0 : i32, i32, i32
  }
  func.func @transform_2(%arg0: i32, %arg1: memref<5xi32, #tpu.memory_space<smem>>, %arg2: memref<5xi32, #tpu.memory_space<smem>>) -> (i32, i32, i32) {
    %0 = arith.index_cast %arg0 : i32 to index
    %1 = memref.load %arg1[%0] : memref<5xi32, #tpu.memory_space<smem>>
    %c0_i32 = arith.constant 0 : i32
    %c0_i32_0 = arith.constant 0 : i32
    %c0_i32_1 = arith.constant 0 : i32
    return %1, %c0_i32, %c0_i32_0 : i32, i32, i32
  }
  func.func @transform_3(%arg0: i32, %arg1: memref<5xi32, #tpu.memory_space<smem>>, %arg2: memref<5xi32, #tpu.memory_space<smem>>) -> (i32, i32) {
    %c0_i32 = arith.constant 0 : i32
    %c0_i32_0 = arith.constant 0 : i32
    return %arg0, %c0_i32 : i32, i32
  }
}

</mosaic_0001>

<llo_original>
// kernel: custom-call
$region0: #{custom-call}
  %s0 = inlined_call_operand.vmem [shape: u32[5], index: 0, kind: output, shape index: {}]

// kernel: conditional_feed_forward.1
$region0: #{conditional_feed_forward.1}
  #allocation0 [shape = 'u32[]', space=smem, size = 0x4, offset = 0x4, fixed_abs, tag = 'smem constant byte address 0x4 - core index']
  #allocation1 [shape = 'u32[144,128]{1,0:T(1,128)}', space=vmem, size = 0x12000, scoped, tag = 'internal scratch']
  #allocation2 [shape = 's32[1]{0}', space=sflag, size = 0x4, scoped, tag = 'scoped memory for conditional_feed_forward.1']
  #allocation3 [shape = 'u8[512]{0}', space=smem, size = 0x200, scoped, tag = 'prefetched SMEM operand 0']
  #allocation4 [shape = 'u8[512]{0}', space=smem, size = 0x200, scoped, tag = 'prefetched SMEM operand 1']
  %s0 = inlined_call_operand.vmem [shape: s32[5], index: 0, kind: input, shape index: {}]
  %s1 = inlined_call_operand.vmem [shape: s32[5], index: 1, kind: input, shape index: {}]
  %s2 = inlined_call_operand.vmem [shape: bf16[80,128], index: 2, kind: input, shape index: {}]
  %s3 = inlined_call_operand.vmem [shape: bf16[4,128,256], index: 3, kind: input, shape index: {}]
  %s4 = inlined_call_operand.vmem [shape: bf16[4,128,128], index: 4, kind: input, shape index: {}]
  %s5 = inlined_call_operand.vmem [shape: f32[80,128], index: 5, kind: output, shape index: {}]
  %s6 = sld [smem:[#allocation0]]
  $region49: #{conditional_feed_forward.1} parent=0
    _
  %s8 = ssub.s32 1, %s6
  %s9 = scalar_select 0, %s8, %s6
  %s10 = sshll.u32 %s0, 4
  %s11 = int_to_ptr.vmem [resolvable:$true] %s10
  %13 = dma.vmem_to_smem %s11, 16, [#allocation3], [#allocation2]
  %s14 = sshll.u32 %s1, 4
  %s15 = int_to_ptr.vmem [resolvable:$true] %s14
  %17 = dma.vmem_to_smem %s15, 16, [#allocation4], [#allocation2]
  %18 = dma.done [#allocation2], 32
  %19 = sfence
  loop: start=0, step=1, limit=7
  $region2: #{conditional_feed_forward.1} parent=0 // loop_pre_header
    _
  $region3: #{conditional_feed_forward.1} parent=0 // loop_header
    %s21 = sphi 0, %s25
    %p22 = scmp.ge.s32.totalorder %s21, 7
    %s31 = sphi 0, %s33
    %s34 = sphi 0, %s31
    %s35 = sphi 0, %s34
    %s51 = sphi 0, %s35
    %s59 = sphi 0, %s61
    %s62 = sphi 0, %s59
    %s63 = sphi 0, %s62
    %s79 = sphi 0, %s63
    %s87 = sphi 0, %s89
    %s90 = sphi 0, %s87
    %s91 = sphi 0, %s90
    %s107 = sphi 0, %s91
    %s113 = sphi 0, %s115
    %s116 = sphi 0, %s113
    %s117 = sphi 0, %s116
    %s133 = sphi 0, %s117
  $region4: #{conditional_feed_forward.1} parent=0 // loop_header_branch
    %24 = sbr.rel (%p22) target = $region8
  $region5: #{conditional_feed_forward.1} parent=0 // loop_body
    %s26 = ssub.s32 %s21, 1
    %s27 = ssub.s32 %s21, 2
    %s28 = sadd.s32 %s21, 1
    %s29 = ssub.s32 %s21, %s28
    %p30 = scmp.eq.s32.totalorder %s29, 0
    %s32 = sadd.s32 %s31, 1
    %s33 = scalar_select %p30, %s31, %s32
    %p36 = pneg %p30
    %p37 = scmp.eq.s32.totalorder %s21, 4
    %p38 = por %p36, %p37
    %p39 = scmp.ne.s32.totalorder %s31, %s34
    %p40 = scmp.eq.s32.totalorder %s21, 0
    %p41 = por %p39, %p40
    %p42 = scmp.ne.s32.totalorder %s31, %s34
    %p43 = scmp.eq.s32.totalorder %s26, 4
    %p44 = por %p42, %p43
    %p45 = scmp.ne.s32.totalorder %s34, %s35
    %p46 = scmp.eq.s32.totalorder %s26, 0
    %p47 = por %p45, %p46
    %p48 = scmp.ne.s32.totalorder %s34, %s35
    %p49 = scmp.eq.s32.totalorder %s27, 4
    %p50 = por %p48, %p49
    %p52 = scmp.ne.s32.totalorder %s35, %s51
    %p53 = scmp.eq.s32.totalorder %s27, 0
    %p54 = por %p52, %p53
    %s55 = sld [smem:[#allocation3 + %s21]]
    %s56 = sld [smem:[#allocation3 + %s28]]
    %s57 = ssub.s32 %s55, %s56
    %p58 = scmp.eq.s32.totalorder %s57, 0
    %s60 = sadd.s32 %s59, 1
    %s61 = scalar_select %p58, %s59, %s60
    %p64 = pneg %p58
    %p65 = scmp.eq.s32.totalorder %s21, 4
    %p66 = por %p64, %p65
    %p67 = scmp.ne.s32.totalorder %s59, %s62
    %p68 = scmp.eq.s32.totalorder %s21, 0
    %p69 = por %p67, %p68
    %p70 = scmp.ne.s32.totalorder %s59, %s62
    %p71 = scmp.eq.s32.totalorder %s26, 4
    %p72 = por %p70, %p71
    %p73 = scmp.ne.s32.totalorder %s62, %s63
    %p74 = scmp.eq.s32.totalorder %s26, 0
    %p75 = por %p73, %p74
    %p76 = scmp.ne.s32.totalorder %s62, %s63
    %p77 = scmp.eq.s32.totalorder %s27, 4
    %p78 = por %p76, %p77
    %p80 = scmp.ne.s32.totalorder %s63, %s79
    %p81 = scmp.eq.s32.totalorder %s27, 0
    %p82 = por %p80, %p81
    %s83 = sld [smem:[#allocation3 + %s21]]
    %s84 = sld [smem:[#allocation3 + %s28]]
    %s85 = ssub.s32 %s83, %s84
    %p86 = scmp.eq.s32.totalorder %s85, 0
    %s88 = sadd.s32 %s87, 1
    %s89 = scalar_select %p86, %s87, %s88
    %p92 = pneg %p86
    %p93 = scmp.eq.s32.totalorder %s21, 4
    %p94 = por %p92, %p93
    %p95 = scmp.ne.s32.totalorder %s87, %s90
    %p96 = scmp.eq.s32.totalorder %s21, 0
    %p97 = por %p95, %p96
    %p98 = scmp.ne.s32.totalorder %s87, %s90
    %p99 = scmp.eq.s32.totalorder %s26, 4
    %p100 = por %p98, %p99
    %p101 = scmp.ne.s32.totalorder %s90, %s91
    %p102 = scmp.eq.s32.totalorder %s26, 0
    %p103 = por %p101, %p102
    %p104 = scmp.ne.s32.totalorder %s90, %s91
    %p105 = scmp.eq.s32.totalorder %s27, 4
    %p106 = por %p104, %p105
    %p108 = scmp.ne.s32.totalorder %s91, %s107
    %p109 = scmp.eq.s32.totalorder %s27, 0
    %p110 = por %p108, %p109
    %s111 = ssub.s32 %s21, %s28
    %p112 = scmp.eq.s32.totalorder %s111, 0
    %s114 = sadd.s32 %s113, 1
    %s115 = scalar_select %p112, %s113, %s114
    %p118 = pneg %p112
    %p119 = scmp.eq.s32.totalorder %s21, 4
    %p120 = por %p118, %p119
    %p121 = scmp.ne.s32.totalorder %s113, %s116
    %p122 = scmp.eq.s32.totalorder %s21, 0
    %p123 = por %p121, %p122
    %p124 = scmp.ne.s32.totalorder %s113, %s116
    %p125 = scmp.eq.s32.totalorder %s26, 4
    %p126 = por %p124, %p125
    %p127 = scmp.ne.s32.totalorder %s116, %s117
    %p128 = scmp.eq.s32.totalorder %s26, 0
    %p129 = por %p127, %p128
    %p130 = scmp.ne.s32.totalorder %s116, %s117
    %p131 = scmp.eq.s32.totalorder %s27, 4
    %p132 = por %p130, %p131
    %p134 = scmp.ne.s32.totalorder %s117, %s133
    %p135 = scmp.eq.s32.totalorder %s27, 0
    %p136 = por %p134, %p135
    %p137 = scmp.le.s32.totalorder 1, %s21
    %p138 = scmp.lt.s32.totalorder %s21, 6
    %p139 = pnand %p137, %p138
    %p140 = pneg %p139
    // Predicated region
    $region9: #{conditional_feed_forward.1} parent=5 // pred_check
      _
    $region10: #{conditional_feed_forward.1} parent=5 // pred_check_branch
      %142 = sbr.rel (%p139) target = $region12
    $region11: #{conditional_feed_forward.1} parent=5 // pred_region
      %s143 = ssub.s32 %s21, 1
    $region12: #{conditional_feed_forward.1} parent=5 // pred_fallthru
      _
    %p144 = scmp.lt.s32.totalorder %s21, 5
    // Predicated region
    $region13: #{conditional_feed_forward.1} parent=5 // pred_check
      %p145 = pneg %p144
    $region14: #{conditional_feed_forward.1} parent=5 // pred_check_branch
      %147 = sbr.rel (%p145) target = $region16
    $region15: #{conditional_feed_forward.1} parent=5 // pred_region
      // Predicated region
      $region17: #{conditional_feed_forward.1} parent=15 // pred_check
        %p148 = pneg %p41
      $region18: #{conditional_feed_forward.1} parent=15 // pred_check_branch
        %150 = sbr.rel (%p148) target = $region20
      $region19: #{conditional_feed_forward.1} parent=15 // pred_region
        %s151 = smul.u32 2, %s21
        %p152 = scmp.lt.s32.totalorder %s151, 9
        %s153 = scalar_select %p152, %s151, 9
        %s154 = smul.addr %s153, 4
        %s155 = scalar_lea.vmem %s2, %s154
        %s156 = smul.u32 2, %s21
      $region20: #{conditional_feed_forward.1} parent=15 // pred_fallthru
        _
      // Predicated region
      $region21: #{conditional_feed_forward.1} parent=15 // pred_check
        %p157 = pneg %p69
      $region22: #{conditional_feed_forward.1} parent=15 // pred_check_branch
        %159 = sbr.rel (%p157) target = $region24
      $region23: #{conditional_feed_forward.1} parent=15 // pred_region
        %s160 = sld [smem:[#allocation3 + %s21]]
        %p161 = scmp.lt.s32.totalorder %s160, 3
        %s162 = scalar_select %p161, %s160, 3
        %s163 = smul.addr %s162, 32
        %s164 = smul.addr %s163, 4
        %s165 = scalar_lea.vmem %s3, %s164
        %s166 = sld [smem:[#allocation3 + %s21]]
      $region24: #{conditional_feed_forward.1} parent=15 // pred_fallthru
        _
      // Predicated region
      $region25: #{conditional_feed_forward.1} parent=15 // pred_check
        %p167 = pneg %p97
      $region26: #{conditional_feed_forward.1} parent=15 // pred_check_branch
        %169 = sbr.rel (%p167) target = $region28
      $region27: #{conditional_feed_forward.1} parent=15 // pred_region
        %s170 = sld [smem:[#allocation3 + %s21]]
        %p171 = scmp.lt.s32.totalorder %s170, 3
        %s172 = scalar_select %p171, %s170, 3
        %s173 = smul.addr %s172, 16
        %s174 = smul.addr %s173, 4
        %s175 = scalar_lea.vmem %s4, %s174
        %s176 = sld [smem:[#allocation3 + %s21]]
      $region28: #{conditional_feed_forward.1} parent=15 // pred_fallthru
        _
    $region16: #{conditional_feed_forward.1} parent=5 // pred_fallthru
      _
    %p177 = scmp.le.s32.totalorder 1, %s21
    %p178 = scmp.lt.s32.totalorder %s21, 6
    %p179 = pnand %p177, %p178
    %p180 = pneg %p179
    // Predicated region
    $region29: #{conditional_feed_forward.1} parent=5 // pred_check
      _
    $region30: #{conditional_feed_forward.1} parent=5 // pred_check_branch
      %182 = sbr.rel (%p179) target = $region32
    $region31: #{conditional_feed_forward.1} parent=5 // pred_region
      %s183 = ssub.s32 %s21, 1
      %s184 = smul.u32 2, %s26
      %p185 = scmp.lt.s32.totalorder %s184, 9
      %s186 = scalar_select %p185, %s184, 9
      %s187 = smul.addr %s186, 4
      %s188 = scalar_lea.vmem %s2, %s187
      %p189 = pneg %p47
      %p190 = pneg %p44
      %s191 = sld [smem:[#allocation3 + %s26]]
      %p192 = scmp.lt.s32.totalorder %s191, 3
      %s193 = scalar_select %p192, %s191, 3
      %s194 = smul.addr %s193, 32
      %s195 = smul.addr %s194, 4
      %s196 = scalar_lea.vmem %s3, %s195
      %p197 = pneg %p75
      %p198 = pneg %p72
      %s199 = sld [smem:[#allocation3 + %s26]]
      %p200 = scmp.lt.s32.totalorder %s199, 3
      %s201 = scalar_select %p200, %s199, 3
      %s202 = smul.addr %s201, 16
      %s203 = smul.addr %s202, 4
      %s204 = scalar_lea.vmem %s4, %s203
      %p205 = pneg %p103
      %p206 = pneg %p100
      %p207 = pneg %p129
      %p208 = pneg %p126
      %s209 = smul.u32 2, %s26
      %p210 = scmp.lt.s32.totalorder %s209, 9
      %s211 = scalar_select %p210, %s209, 9
      %s212 = smul.addr %s211, 8
      %s213 = scalar_lea.vmem %s5, %s212
      %s214 = smul.u32 2, %s26
      %p215 = scmp.lt.s32.totalorder %s214, 9
      %s216 = scalar_select %p215, %s214, 9
      %s217 = smul.addr %s216, 4
      %s218 = scalar_lea.vmem %s2, %s217
      %s219 = smul.u32 2, %s26
      %s220 = sld [smem:[#allocation3 + %s26]]
      %p221 = scmp.lt.s32.totalorder %s220, 3
      %s222 = scalar_select %p221, %s220, 3
      %s223 = smul.addr %s222, 32
      %s224 = smul.addr %s223, 4
      %s225 = scalar_lea.vmem %s3, %s224
      %s226 = sld [smem:[#allocation3 + %s26]]
      %s227 = sld [smem:[#allocation3 + %s26]]
      %p228 = scmp.lt.s32.totalorder %s227, 3
      %s229 = scalar_select %p228, %s227, 3
      %s230 = smul.addr %s229, 16
      %s231 = smul.addr %s230, 4
      %s232 = scalar_lea.vmem %s4, %s231
      %s233 = sld [smem:[#allocation3 + %s26]]
      %s234 = smul.u32 2, %s26
      %p235 = scmp.lt.s32.totalorder %s234, 9
      %s236 = scalar_select %p235, %s234, 9
      %s237 = smul.addr %s236, 8
      %s238 = scalar_lea.vmem %s5, %s237
      %s239 = smul.u32 2, %s26
      %s241 = sld [smem:[#allocation4 + %s26]]
      %p242 = scmp.gt.s32.totalorder %s241, 0
      // Predicated region
      $region33: #{conditional_feed_forward.1} parent=31 // pred_check
        %p243 = pneg %p242
      $region34: #{conditional_feed_forward.1} parent=31 // pred_check_branch
        %245 = sbr.rel (%p243) target = $region36
      $region35: #{conditional_feed_forward.1} parent=31 // pred_region
        %v246 = vld [vmem:[%s218] sm:$0xf]
        %v247 = vld [vmem:[%s218 + $0x4] sm:$0xf]
        %v248 = vld [vmem:[%s225] sm:$0xff]
        %v249 = vld [vmem:[%s225 + $0x8] sm:$0xff]
        %v250 = vld [vmem:[%s225 + $0x10] sm:$0xff]
        %v251 = vld [vmem:[%s225 + $0x18] sm:$0xff]
        %v252 = vld [vmem:[%s225 + $0x20] sm:$0xff]
        %v253 = vld [vmem:[%s225 + $0x28] sm:$0xff]
        %v254 = vld [vmem:[%s225 + $0x30] sm:$0xff]
        %v255 = vld [vmem:[%s225 + $0x38] sm:$0xff]
        %v256 = vld [vmem:[%s225 + $0x40] sm:$0xff]
        %v257 = vld [vmem:[%s225 + $0x48] sm:$0xff]
        %v258 = vld [vmem:[%s225 + $0x50] sm:$0xff]
        %v259 = vld [vmem:[%s225 + $0x58] sm:$0xff]
        %v260 = vld [vmem:[%s225 + $0x60] sm:$0xff]
        %v261 = vld [vmem:[%s225 + $0x68] sm:$0xff]
        %v262 = vld [vmem:[%s225 + $0x70] sm:$0xff]
        %v263 = vld [vmem:[%s225 + $0x78] sm:$0xff]
        %v264 = vld [vmem:[%s232] sm:$0xf]
        %v265 = vld [vmem:[%s232 + $0x4] sm:$0xf]
        %v266 = vld [vmem:[%s232 + $0x8] sm:$0xf]
        %v267 = vld [vmem:[%s232 + $0xc] sm:$0xf]
        %v268 = vld [vmem:[%s232 + $0x10] sm:$0xf]
        %v269 = vld [vmem:[%s232 + $0x14] sm:$0xf]
        %v270 = vld [vmem:[%s232 + $0x18] sm:$0xf]
        %v271 = vld [vmem:[%s232 + $0x1c] sm:$0xf]
        %v272 = vld [vmem:[%s232 + $0x20] sm:$0xf]
        %v273 = vld [vmem:[%s232 + $0x24] sm:$0xf]
        %v274 = vld [vmem:[%s232 + $0x28] sm:$0xf]
        %v275 = vld [vmem:[%s232 + $0x2c] sm:$0xf]
        %v276 = vld [vmem:[%s232 + $0x30] sm:$0xf]
        %v277 = vld [vmem:[%s232 + $0x34] sm:$0xf]
        %v278 = vld [vmem:[%s232 + $0x38] sm:$0xf]
        %v279 = vld [vmem:[%s232 + $0x3c] sm:$0xf]
        %v282 = vunpack.c.l.b16 %v246
        %v283 = vunpack.c.l.b16 %v247
        %v284 = vpack.c.b16 %v283, %v282
        %v302 = vunpack.c.l.b16 %v248
        %v303 = vunpack.c.h.b16 %v248
        %v304 = vunpack.c.l.b16 %v249
        %v305 = vunpack.c.h.b16 %v249
        %v306 = vunpack.c.l.b16 %v250
        %v307 = vunpack.c.h.b16 %v250
        %v308 = vunpack.c.l.b16 %v251
        %v309 = vunpack.c.h.b16 %v251
        %v310 = vunpack.c.l.b16 %v252
        %v311 = vunpack.c.h.b16 %v252
        %v312 = vunpack.c.l.b16 %v253
        %v313 = vunpack.c.h.b16 %v253
        %v314 = vunpack.c.l.b16 %v254
        %v315 = vunpack.c.h.b16 %v254
        %v316 = vunpack.c.l.b16 %v255
        %v317 = vunpack.c.h.b16 %v255
        %v318 = vunpack.c.l.b16 %v256
        %v319 = vunpack.c.h.b16 %v256
        %v320 = vunpack.c.l.b16 %v257
        %v321 = vunpack.c.h.b16 %v257
        %v322 = vunpack.c.l.b16 %v258
        %v323 = vunpack.c.h.b16 %v258
        %v324 = vunpack.c.l.b16 %v259
        %v325 = vunpack.c.h.b16 %v259
        %v326 = vunpack.c.l.b16 %v260
        %v327 = vunpack.c.h.b16 %v260
        %v328 = vunpack.c.l.b16 %v261
        %v329 = vunpack.c.h.b16 %v261
        %v330 = vunpack.c.l.b16 %v262
        %v331 = vunpack.c.h.b16 %v262
        %v332 = vunpack.c.l.b16 %v263
        %v333 = vunpack.c.h.b16 %v263
        %v334 = vpack.c.b16 %v304, %v302
        %v335 = vpack.c.b16 %v305, %v303
        %v336 = vpack.c.b16 %v308, %v306
        %v337 = vpack.c.b16 %v309, %v307
        %v338 = vpack.c.b16 %v312, %v310
        %v339 = vpack.c.b16 %v313, %v311
        %v340 = vpack.c.b16 %v316, %v314
        %v341 = vpack.c.b16 %v317, %v315
        %v342 = vpack.c.b16 %v320, %v318
        %v343 = vpack.c.b16 %v321, %v319
        %v344 = vpack.c.b16 %v324, %v322
        %v345 = vpack.c.b16 %v325, %v323
        %v346 = vpack.c.b16 %v328, %v326
        %v347 = vpack.c.b16 %v329, %v327
        %v348 = vpack.c.b16 %v332, %v330
        %v349 = vpack.c.b16 %v333, %v331
        %366 = vmatprep.subr.bf16.mxu0 %v335
        %367 = vmatpush1.bf16.msra.mxu0 %v334
        %368 = vmatprep.subr.bf16.mxu0 %v337
        %369 = vmatpush1.bf16.msra.mxu0 %v336
        %370 = vmatprep.subr.bf16.mxu0 %v339
        %371 = vmatpush1.bf16.msra.mxu0 %v338
        %372 = vmatprep.subr.bf16.mxu0 %v341
        %373 = vmatpush1.bf16.msra.mxu0 %v340
        %374 = vmatprep.subr.bf16.mxu0 %v343
        %375 = vmatpush1.bf16.msra.mxu0 %v342
        %376 = vmatprep.subr.bf16.mxu0 %v345
        %377 = vmatpush1.bf16.msra.mxu0 %v344
        %378 = vmatprep.subr.bf16.mxu0 %v347
        %379 = vmatpush1.bf16.msra.mxu0 %v346
        %380 = vmatprep.subr.bf16.mxu0 %v349
        %381 = vmatpush1.bf16.msra.mxu0 %v348
        %382 = vmatprep.subr.bf16.mxu0 0
        %383 = vmatpush1.bf16.msra.mxu0 0
        %384 = vmatprep.subr.bf16.mxu0 0
        %385 = vmatpush1.bf16.msra.mxu0 0
        %386 = vmatprep.subr.bf16.mxu0 0
        %387 = vmatpush1.bf16.msra.mxu0 0
        %388 = vmatprep.subr.bf16.mxu0 0
        %389 = vmatpush1.bf16.msra.mxu0 0
        %390 = vmatprep.subr.bf16.mxu0 0
        %391 = vmatpush1.bf16.msra.mxu0 0
        %392 = vmatprep.subr.bf16.mxu0 0
        %393 = vmatpush1.bf16.msra.mxu0 0
        %394 = vmatprep.subr.bf16.mxu0 0
        %395 = vmatpush1.bf16.msra.mxu0 0
        %396 = vmatprep.subr.bf16.mxu0 0
        %397 = vmatpush1.bf16.msra.mxu0 0
        %398 = vmatprep.mubr.bf16.mxu0 0
        %399 = vmatmul.mubr.bf16.gmra.mrb[0].mxu0 %v284
        %v400 = vpop.f32.mrb[0].mxu0
        %v401 = vadd.f32 0.0, %v400
        %v402 = vpop.f32.mrb[0].mxu0
        %v403 = vadd.f32 0.0, %v402
        %v404 = vpop.f32.mrb[0].mxu0
        %v405 = vadd.f32 0.0, %v404
        %v406 = vpop.f32.mrb[0].mxu0
        %v407 = vadd.f32 0.0, %v406
        %408 = vdwg.mxu0
        %v409 = vxor.u32 %v401, 2147483648
        %v410 = vxor.u32 %v405, 2147483648
        %v411 = vmul.f32 %v409, 1.442695
        %v412 = vpow.pop %v411
        %v413 = vmul.f32 %v410, 1.442695
        %v414 = vpow.pop %v413
        %v415 = vadd.f32 %v412, 1.0
        %v416 = vadd.f32 %v414, 1.0
        %v417 = vrcp.pop %v415
        %v418 = vmul.f32 1.0, %v417
        %v419 = vrcp.pop %v416
        %v420 = vmul.f32 1.0, %v419
        %v421 = vmul.f32 %v401, %v418
        %v422 = vmul.f32 %v405, %v420
        %v423 = vmul.f32 %v421, %v403
        %v424 = vmul.f32 %v422, %v407
        %v425 = vpack.c.bf16 %v424, %v423
        %v442 = vunpack.c.l.b16 %v264
        %v443 = vunpack.c.l.b16 %v265
        %v444 = vunpack.c.l.b16 %v266
        %v445 = vunpack.c.l.b16 %v267
        %v446 = vunpack.c.l.b16 %v268
        %v447 = vunpack.c.l.b16 %v269
        %v448 = vunpack.c.l.b16 %v270
        %v449 = vunpack.c.l.b16 %v271
        %v450 = vunpack.c.l.b16 %v272
        %v451 = vunpack.c.l.b16 %v273
        %v452 = vunpack.c.l.b16 %v274
        %v453 = vunpack.c.l.b16 %v275
        %v454 = vunpack.c.l.b16 %v276
        %v455 = vunpack.c.l.b16 %v277
        %v456 = vunpack.c.l.b16 %v278
        %v457 = vunpack.c.l.b16 %v279
        %v458 = vpack.c.b16 %v443, %v442
        %v459 = vpack.c.b16 %v445, %v444
        %v460 = vpack.c.b16 %v447, %v446
        %v461 = vpack.c.b16 %v449, %v448
        %v462 = vpack.c.b16 %v451, %v450
        %v463 = vpack.c.b16 %v453, %v452
        %v464 = vpack.c.b16 %v455, %v454
        %v465 = vpack.c.b16 %v457, %v456
        %474 = vmatprep.subr.bf16.mxu0 0
        %475 = vmatpush1.bf16.msra.mxu0 %v458
        %476 = vmatprep.subr.bf16.mxu0 0
        %477 = vmatpush1.bf16.msra.mxu0 %v459
        %478 = vmatprep.subr.bf16.mxu0 0
        %479 = vmatpush1.bf16.msra.mxu0 %v460
        %480 = vmatprep.subr.bf16.mxu0 0
        %481 = vmatpush1.bf16.msra.mxu0 %v461
        %482 = vmatprep.subr.bf16.mxu0 0
        %483 = vmatpush1.bf16.msra.mxu0 %v462
        %484 = vmatprep.subr.bf16.mxu0 0
        %485 = vmatpush1.bf16.msra.mxu0 %v463
        %486 = vmatprep.subr.bf16.mxu0 0
        %487 = vmatpush1.bf16.msra.mxu0 %v464
        %488 = vmatprep.subr.bf16.mxu0 0
        %489 = vmatpush1.bf16.msra.mxu0 %v465
        %490 = vmatprep.subr.bf16.mxu0 0
        %491 = vmatpush1.bf16.msra.mxu0 0
        %492 = vmatprep.subr.bf16.mxu0 0
        %493 = vmatpush1.bf16.msra.mxu0 0
        %494 = vmatprep.subr.bf16.mxu0 0
        %495 = vmatpush1.bf16.msra.mxu0 0
        %496 = vmatprep.subr.bf16.mxu0 0
        %497 = vmatpush1.bf16.msra.mxu0 0
        %498 = vmatprep.subr.bf16.mxu0 0
        %499 = vmatpush1.bf16.msra.mxu0 0
        %500 = vmatprep.subr.bf16.mxu0 0
        %501 = vmatpush1.bf16.msra.mxu0 0
        %502 = vmatprep.subr.bf16.mxu0 0
        %503 = vmatpush1.bf16.msra.mxu0 0
        %504 = vmatprep.subr.bf16.mxu0 0
        %505 = vmatpush1.bf16.msra.mxu0 0
        %506 = vmatprep.mubr.bf16.mxu0 0
        %507 = vmatmul.mubr.bf16.gmra.mrb[0].mxu0 %v425
        %v508 = vpop.f32.mrb[0].mxu0
        %v509 = vadd.f32 0.0, %v508
        %v510 = vpop.f32.mrb[0].mxu0
        %v511 = vpop.f32.mrb[0].mxu0
        %v512 = vadd.f32 0.0, %v511
        %v513 = vpop.f32.mrb[0].mxu0
        %514 = vdwg.mxu0
        %515 = vst [vmem:[%s238] sm:$0xff] %v509
        %516 = vst [vmem:[%s238 + $0x8] sm:$0xff] %v512
      $region36: #{conditional_feed_forward.1} parent=31 // pred_fallthru
        _
      %s517 = smul.u32 2, %s26
      %p518 = scmp.lt.s32.totalorder %s517, 9
      %s519 = scalar_select %p518, %s517, 9
      %s520 = smul.addr %s519, 8
      %s521 = scalar_lea.vmem %s5, %s520
      // Predicated region
      $region37: #{conditional_feed_forward.1} parent=31 // pred_check
        %p522 = pneg %p126
      $region38: #{conditional_feed_forward.1} parent=31 // pred_check_branch
        %524 = sbr.rel (%p522) target = $region40
      $region39: #{conditional_feed_forward.1} parent=31 // pred_region
        %s525 = smul.u32 2, %s26
      $region40: #{conditional_feed_forward.1} parent=31 // pred_fallthru
        _
    $region32: #{conditional_feed_forward.1} parent=5 // pred_fallthru
      _
    %p526 = scmp.le.s32.totalorder 2, %s21
    // Predicated region
    $region41: #{conditional_feed_forward.1} parent=5 // pred_check
      %p527 = pneg %p526
    $region42: #{conditional_feed_forward.1} parent=5 // pred_check_branch
      %529 = sbr.rel (%p527) target = $region44
    $region43: #{conditional_feed_forward.1} parent=5 // pred_region
      %s530 = ssub.s32 %s21, 2
      // Predicated region
      $region45: #{conditional_feed_forward.1} parent=43 // pred_check
        %p531 = pneg %p132
      $region46: #{conditional_feed_forward.1} parent=43 // pred_check_branch
        %533 = sbr.rel (%p531) target = $region48
      $region47: #{conditional_feed_forward.1} parent=43 // pred_region
        %s534 = smul.u32 2, %s27
        %p535 = scmp.lt.s32.totalorder %s534, 9
        %s536 = scalar_select %p535, %s534, 9
        %s537 = smul.addr %s536, 8
        %s538 = scalar_lea.vmem %s5, %s537
      $region48: #{conditional_feed_forward.1} parent=43 // pred_fallthru
        _
    $region44: #{conditional_feed_forward.1} parent=5 // pred_fallthru
      _
  $region6: #{conditional_feed_forward.1} parent=0 // loop_footer
    %s25 = sadd.s32 1, %s21
  $region7: #{conditional_feed_forward.1} parent=0 // loop_footer_branch
    %20 = sbr.rel target = $region3
  $region8: #{conditional_feed_forward.1} parent=0 // loop_exit
    _

</llo_original>
